<compile_context>
chip_gen: v7x
topology: tpu7x:2x2x1
jax: 0.10.0
libtpu: 0.0.40
codegen_flags: <defaults>
</compile_context>

<pallas_src>
import functools

import jax
import jax.numpy as jnp
from jax import lax
from jax.experimental import pallas as pl
from jax.experimental.pallas import tpu as pltpu


# Tap order matches the flattened weight layout: tap index t = (ky+1)*3 + (kx+1).
_TAPS = tuple((ky, kx) for ky in (-1, 0, 1) for kx in (-1, 0, 1))


def _conv_block_kernel(x_ref, m_in_ref, m_out_ref,
                       w3a_ref, bias1_ref, sa_ref, ba_ref,
                       w3b_ref, sb_ref, bb_ref,
                       o_ref, *, width):
    """Single grid step, whole batch, lane-dense (C, L) layout (L = N*H*W, padded).

    x_ref:     (Cin,  L)       input activations
    m_in_ref:  (9, Cin,  L)    pre-broadcast 0/1 zero-padding masks for im2col(x)
    m_out_ref: (9, Cout, L)    pre-broadcast 0/1 zero-padding masks for im2col(y)
    w3a_ref:   (Cout, 9*Cin)   first 3x3 conv with the 1x1 conv folded in
    bias1_ref: (Cout, L)       conv3x3 of the 1x1 bias (spatially varying at the border)
    sa/ba, sb/bb: (Cout, 1)    folded eval-mode BatchNorm scale / bias
    w3b_ref:   (Cout, 9*Cout)  second 3x3 conv
    o_ref:     (Cout, L)       output
    """
    L = x_ref.shape[-1]

    def im2col(v, m_ref):
        # 9 lane-rolled copies (XLU slot) with 0/1 masks implementing the conv
        # zero padding.  Every out-of-image source position -- including
        # row-wrap, cross-image wrap and wrap into the lane padding -- is
        # zeroed by its mask, so one big flattened lane axis is exact.
        taps = []
        for t, (ky, kx) in enumerate(_TAPS):
            shift = (-(ky * width + kx)) % L                 # static, non-negative
            r = v if shift == 0 else pltpu.roll(v, shift=shift, axis=1)
            if ky != 0 or kx != 0:
                r = r * m_ref[t]
            taps.append(r)
        return jnp.concatenate(taps, axis=0)                 # (9*C, L)

    x = x_ref[...].astype(jnp.float32)

    # ---- Block 1: (1x1 conv + bias) folded into the first 3x3: one matmul ----
    z = jnp.dot(w3a_ref[...], im2col(x, m_in_ref),
                preferred_element_type=jnp.float32)
    z = z + bias1_ref[...]                                   # border-aware 1x1 bias map
    z = z * sa_ref[...] + ba_ref[...]                        # folded BatchNorm (eval)
    y = jnp.where(z > 0, z, 0.1 * z)                         # LeakyReLU(0.1); Dropout2d(0)=id

    # ---- Block 2: second 3x3 conv + BN + LeakyReLU ----
    z = jnp.dot(w3b_ref[...], im2col(y, m_out_ref),
                preferred_element_type=jnp.float32)
    z = z * sb_ref[...] + bb_ref[...]
    o_ref[...] = jnp.where(z > 0, z, 0.1 * z).astype(o_ref.dtype)


def _tap_masks(H, W):
    """(9, H*W) 0/1 masks: for each tap, whether its source pixel is inside the image."""
    h = jnp.arange(H).reshape(H, 1)
    w = jnp.arange(W).reshape(1, W)
    rows = []
    for ky, kx in _TAPS:
        valid = (h + ky >= 0) & (h + ky < H) & (w + kx >= 0) & (w + kx < W)
        rows.append(valid.reshape(H * W))
    return jnp.stack(rows, axis=0).astype(jnp.float32)


def _prep_kernel_params(params, masks_flat):
    """Torch-layout params -> lane-dense kernel layout; fold 1x1 into first 3x3."""
    w11, b11, w3a, sa, ba, w3b, sb, bb = params
    cout, cin = w11.shape[0], w11.shape[1]

    w11_m = w11.reshape(cout, cin)                           # (Cout, Cin)

    def taps3x3(w):                                          # (Cout, C, 3, 3) -> (Cout, 9, C)
        return jnp.transpose(w, (0, 2, 3, 1)).reshape(cout, 9, w.shape[1])

    w3a_t = taps3x3(w3a)                                     # (Cout, 9, Cout)
    # conv3x3_a(conv1x1(x)) == (W3a . W11) applied to im2col(x).
    w3a_eff = jnp.einsum('otc,ci->oti', w3a_t, w11_m).reshape(cout, 9 * cin)
    # conv3x3_a of the spatially-constant 1x1 bias: per-pixel sum of valid taps.
    tap_bias = jnp.einsum('otc,c->to', w3a_t, b11)           # (9, Cout)
    bias_map = jnp.einsum('tp,to->op', masks_flat, tap_bias)  # (Cout, H*W)

    w3b_flat = taps3x3(w3b).reshape(cout, 9 * cout)          # col = t*Cout + ci

    col = lambda v: v.reshape(cout, 1)
    return (w3a_eff, bias_map, col(sa), col(ba), w3b_flat, col(sb), col(bb))


def conv_module_pallas(x_nchw, params):
    """x_nchw: (N, Cin, H, W) float32  ->  (N, Cout, H, W) float32."""
    N, Cin, H, W = x_nchw.shape
    HW = H * W
    L = N * HW
    Lp = ((L + 127) // 128) * 128                            # lane-dense stores

    masks_flat = _tap_masks(H, W)                            # (9, HW)
    (w3a_eff, bias_map, sa_k, ba_k,
     w3b_k, sb_k, bb_k) = _prep_kernel_params(params, masks_flat)
    Cout = w3a_eff.shape[0]

    def pad(a):
        if a.shape[-1] == Lp:
            return a
        return jnp.pad(a, [(0, 0)] * (a.ndim - 1) + [(0, Lp - a.shape[-1])])

    # Batch folded onto the lane axis: (N,Cin,H,W) -> (Cin, N*HW).  One grid
    # step and one matmul per conv layer for the whole batch.
    x_flat = pad(jnp.transpose(x_nchw, (1, 0, 2, 3)).reshape(Cin, L))

    m_tiled = jnp.tile(masks_flat, (1, N))                   # (9, L)
    m_in = pad(jnp.broadcast_to(m_tiled[:, None, :], (9, Cin, L)))
    m_out = pad(jnp.broadcast_to(m_tiled[:, None, :], (9, Cout, L)))
    bias1 = pad(jnp.tile(bias_map, (1, N)))                  # (Cout, L)

    full = lambda a: pl.BlockSpec(a.shape, lambda i: (0,) * a.ndim)
    args = (x_flat, m_in, m_out, w3a_eff, bias1, sa_k, ba_k, w3b_k, sb_k, bb_k)

    out_flat = pl.pallas_call(
        functools.partial(_conv_block_kernel, width=W),
        out_shape=jax.ShapeDtypeStruct((Cout, Lp), jnp.float32),
        grid_spec=pltpu.PrefetchScalarGridSpec(
            num_scalar_prefetch=0,
            grid=(1,),
            in_specs=[full(a) for a in args],
            out_specs=pl.BlockSpec((Cout, Lp), lambda i: (0, 0)),
        ),
        compiler_params=pltpu.CompilerParams(
            dimension_semantics=("arbitrary",)),
    )(*args)

    out = out_flat[:, :L].reshape(Cout, N, H, W)
    return jnp.transpose(out, (1, 0, 2, 3))                  # (N, Cout, H, W)


def init_params(key, in_c, out_c, eps=1e-5):
    """Deterministic synthetic parameters in PyTorch layout.

    w11: (Cout, Cin, 1, 1), b11: (Cout,), w3*: (Cout, Cout, 3, 3).
    BatchNorm (eval-mode running stats) folded to scale/bias of shape (Cout,).
    Dropout2d(dp=0) is identity.
    """
    ks = jax.random.split(key, 6)
    w11 = jax.random.normal(ks[0], (out_c, in_c, 1, 1), jnp.float32) * 0.2
    b11 = jax.random.normal(ks[1], (out_c,), jnp.float32) * 0.1
    w3a = jax.random.normal(ks[2], (out_c, out_c, 3, 3), jnp.float32) * 0.1
    w3b = jax.random.normal(ks[3], (out_c, out_c, 3, 3), jnp.float32) * 0.1

    def bn_fold(k):
        k1, k2, k3, k4 = jax.random.split(k, 4)
        gamma = 1.0 + 0.1 * jax.random.normal(k1, (out_c,), jnp.float32)
        beta = 0.1 * jax.random.normal(k2, (out_c,), jnp.float32)
        mean = 0.1 * jax.random.normal(k3, (out_c,), jnp.float32)
        var = jnp.abs(1.0 + 0.1 * jax.random.normal(k4, (out_c,), jnp.float32))
        scale = gamma / jnp.sqrt(var + eps)
        bias = beta - mean * scale
        return scale, bias

    sa, ba = bn_fold(ks[4])
    sb, bb = bn_fold(ks[5])
    return (w11, b11, w3a, sa, ba, w3b, sb, bb)


def _reference_jax(x_nchw, params):
    """Pure-JAX reference (lax.conv, NCHW/OIHW) for correctness checking."""
    w11, b11, w3a, sa, ba, w3b, sb, bb = params
    dn1 = lax.conv_dimension_numbers(x_nchw.shape, w11.shape,
                                     ("NCHW", "OIHW", "NCHW"))
    y = lax.conv_general_dilated(x_nchw, w11, (1, 1), "VALID",
                                 dimension_numbers=dn1)
    y = y + b11[None, :, None, None]

    def block(y, w3, s, b):
        dn3 = lax.conv_dimension_numbers(y.shape, w3.shape,
                                         ("NCHW", "OIHW", "NCHW"))
        z = lax.conv_general_dilated(y, w3, (1, 1), "SAME",
                                     dimension_numbers=dn3)
        z = z * s[None, :, None, None] + b[None, :, None, None]
        return jnp.where(z > 0, z, 0.1 * z)

    y = block(y, w3a, sa, ba)
    y = block(y, w3b, sb, bb)
    return y


if __name__ == "__main__":
    N, in_c, out_c, H, W = 2, 4, 8, 16, 16
    key = jax.random.PRNGKey(0)
    kx, kp = jax.random.split(key)
    x = jax.random.normal(kx, (N, in_c, H, W), jnp.float32)
    params = init_params(kp, in_c, out_c)

    out = conv_module_pallas(x, params)
    out = jax.block_until_ready(out)

    ref = _reference_jax(x, params)
    assert out.shape == (N, out_c, H, W)
    err = float(jnp.max(jnp.abs(out - ref)))
    assert err < 5e-4, f"mismatch vs JAX reference: {err}"

    print("KERNEL_OK")
</pallas_src>

<mosaic_0001>
module attributes {stable_mosaic.version = 11 : i64} {
  func.func @_conv_block_kernel(%arg0: i32, %arg1: memref<4x512xf32, #tpu.memory_space<vmem>>, %arg2: memref<9x4x512xf32, #tpu.memory_space<vmem>>, %arg3: memref<9x8x512xf32, #tpu.memory_space<vmem>>, %arg4: memref<8x36xf32, #tpu.memory_space<vmem>>, %arg5: memref<8x512xf32, #tpu.memory_space<vmem>>, %arg6: memref<8x1xf32, #tpu.memory_space<vmem>>, %arg7: memref<8x1xf32, #tpu.memory_space<vmem>>, %arg8: memref<8x72xf32, #tpu.memory_space<vmem>>, %arg9: memref<8x1xf32, #tpu.memory_space<vmem>>, %arg10: memref<8x1xf32, #tpu.memory_space<vmem>>, %arg11: memref<8x512xf32, #tpu.memory_space<vmem>>) attributes {dimension_semantics = [#tpu.dimension_semantics<arbitrary>], iteration_bounds = array<i64: 1>, scalar_prefetch = 0 : i64, scratch_operands = 0 : i64, tpu.core_type = #tpu.core_type<tc>, window_params = [{pipeline_mode = #tpu.pipeline_mode<synchronous>, transform_indices = @transform_0, window_bounds = array<i64: 4, 512>}, {pipeline_mode = #tpu.pipeline_mode<synchronous>, transform_indices = @transform_1, window_bounds = array<i64: 9, 4, 512>}, {pipeline_mode = #tpu.pipeline_mode<synchronous>, transform_indices = @transform_2, window_bounds = array<i64: 9, 8, 512>}, {pipeline_mode = #tpu.pipeline_mode<synchronous>, transform_indices = @transform_3, window_bounds = array<i64: 8, 36>}, {pipeline_mode = #tpu.pipeline_mode<synchronous>, transform_indices = @transform_4, window_bounds = array<i64: 8, 512>}, {pipeline_mode = #tpu.pipeline_mode<synchronous>, transform_indices = @transform_5, window_bounds = array<i64: 8, 1>}, {pipeline_mode = #tpu.pipeline_mode<synchronous>, transform_indices = @transform_6, window_bounds = array<i64: 8, 1>}, {pipeline_mode = #tpu.pipeline_mode<synchronous>, transform_indices = @transform_7, window_bounds = array<i64: 8, 72>}, {pipeline_mode = #tpu.pipeline_mode<synchronous>, transform_indices = @transform_8, window_bounds = array<i64: 8, 1>}, {pipeline_mode = #tpu.pipeline_mode<synchronous>, transform_indices = @transform_9, window_bounds = array<i64: 8, 1>}, {pipeline_mode = #tpu.pipeline_mode<synchronous>, transform_indices = @transform_10, window_bounds = array<i64: 8, 512>}]} {
    %c0 = arith.constant 0 : index
    %c0_0 = arith.constant 0 : index
    %0 = vector.load %arg1[%c0, %c0_0] : memref<4x512xf32, #tpu.memory_space<vmem>>, vector<4x512xf32>
    %c0_1 = arith.constant 0 : index
    %c0_2 = arith.constant 0 : index
    %1 = vector.load %arg4[%c0_1, %c0_2] : memref<8x36xf32, #tpu.memory_space<vmem>>, vector<8x36xf32>
    %c17_i32 = arith.constant 17 : i32
    %2 = tpu.dynamic_rotate %0 by %c17_i32 dim 1 : vector<4x512xf32>, i32 -> vector<4x512xf32>
    %c0_3 = arith.constant 0 : index
    %c0_4 = arith.constant 0 : index
    %c0_5 = arith.constant 0 : index
    %3 = vector.load %arg2[%c0_3, %c0_4, %c0_5] : memref<9x4x512xf32, #tpu.memory_space<vmem>>, vector<1x4x512xf32>
    %4 = vector.shape_cast %3 : vector<1x4x512xf32> to vector<4x512xf32>
    %5 = arith.mulf %2, %4 : vector<4x512xf32>
    %c16_i32 = arith.constant 16 : i32
    %6 = tpu.dynamic_rotate %0 by %c16_i32 dim 1 : vector<4x512xf32>, i32 -> vector<4x512xf32>
    %c1 = arith.constant 1 : index
    %c0_6 = arith.constant 0 : index
    %c0_7 = arith.constant 0 : index
    %7 = vector.load %arg2[%c1, %c0_6, %c0_7] : memref<9x4x512xf32, #tpu.memory_space<vmem>>, vector<1x4x512xf32>
    %8 = vector.shape_cast %7 : vector<1x4x512xf32> to vector<4x512xf32>
    %9 = arith.mulf %6, %8 : vector<4x512xf32>
    %c15_i32 = arith.constant 15 : i32
    %10 = tpu.dynamic_rotate %0 by %c15_i32 dim 1 : vector<4x512xf32>, i32 -> vector<4x512xf32>
    %c2 = arith.constant 2 : index
    %c0_8 = arith.constant 0 : index
    %c0_9 = arith.constant 0 : index
    %11 = vector.load %arg2[%c2, %c0_8, %c0_9] : memref<9x4x512xf32, #tpu.memory_space<vmem>>, vector<1x4x512xf32>
    %12 = vector.shape_cast %11 : vector<1x4x512xf32> to vector<4x512xf32>
    %13 = arith.mulf %10, %12 : vector<4x512xf32>
    %c1_i32 = arith.constant 1 : i32
    %14 = tpu.dynamic_rotate %0 by %c1_i32 dim 1 : vector<4x512xf32>, i32 -> vector<4x512xf32>
    %c3 = arith.constant 3 : index
    %c0_10 = arith.constant 0 : index
    %c0_11 = arith.constant 0 : index
    %15 = vector.load %arg2[%c3, %c0_10, %c0_11] : memref<9x4x512xf32, #tpu.memory_space<vmem>>, vector<1x4x512xf32>
    %16 = vector.shape_cast %15 : vector<1x4x512xf32> to vector<4x512xf32>
    %17 = arith.mulf %14, %16 : vector<4x512xf32>
    %c511_i32 = arith.constant 511 : i32
    %18 = tpu.dynamic_rotate %0 by %c511_i32 dim 1 : vector<4x512xf32>, i32 -> vector<4x512xf32>
    %c5 = arith.constant 5 : index
    %c0_12 = arith.constant 0 : index
    %c0_13 = arith.constant 0 : index
    %19 = vector.load %arg2[%c5, %c0_12, %c0_13] : memref<9x4x512xf32, #tpu.memory_space<vmem>>, vector<1x4x512xf32>
    %20 = vector.shape_cast %19 : vector<1x4x512xf32> to vector<4x512xf32>
    %21 = arith.mulf %18, %20 : vector<4x512xf32>
    %c497_i32 = arith.constant 497 : i32
    %22 = tpu.dynamic_rotate %0 by %c497_i32 dim 1 : vector<4x512xf32>, i32 -> vector<4x512xf32>
    %c6 = arith.constant 6 : index
    %c0_14 = arith.constant 0 : index
    %c0_15 = arith.constant 0 : index
    %23 = vector.load %arg2[%c6, %c0_14, %c0_15] : memref<9x4x512xf32, #tpu.memory_space<vmem>>, vector<1x4x512xf32>
    %24 = vector.shape_cast %23 : vector<1x4x512xf32> to vector<4x512xf32>
    %25 = arith.mulf %22, %24 : vector<4x512xf32>
    %c496_i32 = arith.constant 496 : i32
    %26 = tpu.dynamic_rotate %0 by %c496_i32 dim 1 : vector<4x512xf32>, i32 -> vector<4x512xf32>
    %c7 = arith.constant 7 : index
    %c0_16 = arith.constant 0 : index
    %c0_17 = arith.constant 0 : index
    %27 = vector.load %arg2[%c7, %c0_16, %c0_17] : memref<9x4x512xf32, #tpu.memory_space<vmem>>, vector<1x4x512xf32>
    %28 = vector.shape_cast %27 : vector<1x4x512xf32> to vector<4x512xf32>
    %29 = arith.mulf %26, %28 : vector<4x512xf32>
    %c495_i32 = arith.constant 495 : i32
    %30 = tpu.dynamic_rotate %0 by %c495_i32 dim 1 : vector<4x512xf32>, i32 -> vector<4x512xf32>
    %c8 = arith.constant 8 : index
    %c0_18 = arith.constant 0 : index
    %c0_19 = arith.constant 0 : index
    %31 = vector.load %arg2[%c8, %c0_18, %c0_19] : memref<9x4x512xf32, #tpu.memory_space<vmem>>, vector<1x4x512xf32>
    %32 = vector.shape_cast %31 : vector<1x4x512xf32> to vector<4x512xf32>
    %33 = arith.mulf %30, %32 : vector<4x512xf32>
    %34 = tpu.concatenate %5, %9, %13, %17, %0, %21, %25, %29, %33 in 0 : vector<4x512xf32>, vector<4x512xf32>, vector<4x512xf32>, vector<4x512xf32>, vector<4x512xf32>, vector<4x512xf32>, vector<4x512xf32>, vector<4x512xf32>, vector<4x512xf32> -> vector<36x512xf32>
    %cst = arith.constant dense<0.000000e+00> : vector<8x512xf32>
    %35 = tpu.matmul %1, %34, %cst {dimension_numbers = #tpu.dot_dimension_numbers<[1], [0], [0], [1], [0, 0, 1, 1], [], []>} : vector<8x36xf32>, vector<36x512xf32>, vector<8x512xf32> -> vector<8x512xf32>
    %c0_20 = arith.constant 0 : index
    %c0_21 = arith.constant 0 : index
    %36 = vector.load %arg5[%c0_20, %c0_21] : memref<8x512xf32, #tpu.memory_space<vmem>>, vector<8x512xf32>
    %37 = arith.addf %35, %36 : vector<8x512xf32>
    %c0_22 = arith.constant 0 : index
    %c0_23 = arith.constant 0 : index
    %38 = vector.load %arg6[%c0_22, %c0_23] : memref<8x1xf32, #tpu.memory_space<vmem>>, vector<8x1xf32>
    %39 = vector.broadcast %38 : vector<8x1xf32> to vector<8x512xf32>
    %40 = arith.mulf %37, %39 : vector<8x512xf32>
    %c0_24 = arith.constant 0 : index
    %c0_25 = arith.constant 0 : index
    %41 = vector.load %arg7[%c0_24, %c0_25] : memref<8x1xf32, #tpu.memory_space<vmem>>, vector<8x1xf32>
    %42 = vector.broadcast %41 : vector<8x1xf32> to vector<8x512xf32>
    %43 = arith.addf %40, %42 : vector<8x512xf32>
    %cst_26 = arith.constant 0.000000e+00 : f32
    %44 = vector.broadcast %cst_26 : f32 to vector<8x512xf32>
    %45 = arith.cmpf ogt, %43, %44 : vector<8x512xf32>
    %cst_27 = arith.constant 1.000000e-01 : f32
    %46 = vector.broadcast %cst_27 : f32 to vector<8x512xf32>
    %47 = arith.mulf %46, %43 : vector<8x512xf32>
    %48 = arith.select %45, %43, %47 : vector<8x512xi1>, vector<8x512xf32>
    %c0_28 = arith.constant 0 : index
    %c0_29 = arith.constant 0 : index
    %49 = vector.load %arg8[%c0_28, %c0_29] : memref<8x72xf32, #tpu.memory_space<vmem>>, vector<8x72xf32>
    %c17_i32_30 = arith.constant 17 : i32
    %50 = tpu.dynamic_rotate %48 by %c17_i32_30 dim 1 : vector<8x512xf32>, i32 -> vector<8x512xf32>
    %c0_31 = arith.constant 0 : index
    %c0_32 = arith.constant 0 : index
    %c0_33 = arith.constant 0 : index
    %51 = vector.load %arg3[%c0_31, %c0_32, %c0_33] : memref<9x8x512xf32, #tpu.memory_space<vmem>>, vector<1x8x512xf32>
    %52 = vector.shape_cast %51 : vector<1x8x512xf32> to vector<8x512xf32>
    %53 = arith.mulf %50, %52 : vector<8x512xf32>
    %c16_i32_34 = arith.constant 16 : i32
    %54 = tpu.dynamic_rotate %48 by %c16_i32_34 dim 1 : vector<8x512xf32>, i32 -> vector<8x512xf32>
    %c1_35 = arith.constant 1 : index
    %c0_36 = arith.constant 0 : index
    %c0_37 = arith.constant 0 : index
    %55 = vector.load %arg3[%c1_35, %c0_36, %c0_37] : memref<9x8x512xf32, #tpu.memory_space<vmem>>, vector<1x8x512xf32>
    %56 = vector.shape_cast %55 : vector<1x8x512xf32> to vector<8x512xf32>
    %57 = arith.mulf %54, %56 : vector<8x512xf32>
    %c15_i32_38 = arith.constant 15 : i32
    %58 = tpu.dynamic_rotate %48 by %c15_i32_38 dim 1 : vector<8x512xf32>, i32 -> vector<8x512xf32>
    %c2_39 = arith.constant 2 : index
    %c0_40 = arith.constant 0 : index
    %c0_41 = arith.constant 0 : index
    %59 = vector.load %arg3[%c2_39, %c0_40, %c0_41] : memref<9x8x512xf32, #tpu.memory_space<vmem>>, vector<1x8x512xf32>
    %60 = vector.shape_cast %59 : vector<1x8x512xf32> to vector<8x512xf32>
    %61 = arith.mulf %58, %60 : vector<8x512xf32>
    %c1_i32_42 = arith.constant 1 : i32
    %62 = tpu.dynamic_rotate %48 by %c1_i32_42 dim 1 : vector<8x512xf32>, i32 -> vector<8x512xf32>
    %c3_43 = arith.constant 3 : index
    %c0_44 = arith.constant 0 : index
    %c0_45 = arith.constant 0 : index
    %63 = vector.load %arg3[%c3_43, %c0_44, %c0_45] : memref<9x8x512xf32, #tpu.memory_space<vmem>>, vector<1x8x512xf32>
    %64 = vector.shape_cast %63 : vector<1x8x512xf32> to vector<8x512xf32>
    %65 = arith.mulf %62, %64 : vector<8x512xf32>
    %c511_i32_46 = arith.constant 511 : i32
    %66 = tpu.dynamic_rotate %48 by %c511_i32_46 dim 1 : vector<8x512xf32>, i32 -> vector<8x512xf32>
    %c5_47 = arith.constant 5 : index
    %c0_48 = arith.constant 0 : index
    %c0_49 = arith.constant 0 : index
    %67 = vector.load %arg3[%c5_47, %c0_48, %c0_49] : memref<9x8x512xf32, #tpu.memory_space<vmem>>, vector<1x8x512xf32>
    %68 = vector.shape_cast %67 : vector<1x8x512xf32> to vector<8x512xf32>
    %69 = arith.mulf %66, %68 : vector<8x512xf32>
    %c497_i32_50 = arith.constant 497 : i32
    %70 = tpu.dynamic_rotate %48 by %c497_i32_50 dim 1 : vector<8x512xf32>, i32 -> vector<8x512xf32>
    %c6_51 = arith.constant 6 : index
    %c0_52 = arith.constant 0 : index
    %c0_53 = arith.constant 0 : index
    %71 = vector.load %arg3[%c6_51, %c0_52, %c0_53] : memref<9x8x512xf32, #tpu.memory_space<vmem>>, vector<1x8x512xf32>
    %72 = vector.shape_cast %71 : vector<1x8x512xf32> to vector<8x512xf32>
    %73 = arith.mulf %70, %72 : vector<8x512xf32>
    %c496_i32_54 = arith.constant 496 : i32
    %74 = tpu.dynamic_rotate %48 by %c496_i32_54 dim 1 : vector<8x512xf32>, i32 -> vector<8x512xf32>
    %c7_55 = arith.constant 7 : index
    %c0_56 = arith.constant 0 : index
    %c0_57 = arith.constant 0 : index
    %75 = vector.load %arg3[%c7_55, %c0_56, %c0_57] : memref<9x8x512xf32, #tpu.memory_space<vmem>>, vector<1x8x512xf32>
    %76 = vector.shape_cast %75 : vector<1x8x512xf32> to vector<8x512xf32>
    %77 = arith.mulf %74, %76 : vector<8x512xf32>
    %c495_i32_58 = arith.constant 495 : i32
    %78 = tpu.dynamic_rotate %48 by %c495_i32_58 dim 1 : vector<8x512xf32>, i32 -> vector<8x512xf32>
    %c8_59 = arith.constant 8 : index
    %c0_60 = arith.constant 0 : index
    %c0_61 = arith.constant 0 : index
    %79 = vector.load %arg3[%c8_59, %c0_60, %c0_61] : memref<9x8x512xf32, #tpu.memory_space<vmem>>, vector<1x8x512xf32>
    %80 = vector.shape_cast %79 : vector<1x8x512xf32> to vector<8x512xf32>
    %81 = arith.mulf %78, %80 : vector<8x512xf32>
    %82 = tpu.concatenate %53, %57, %61, %65, %48, %69, %73, %77, %81 in 0 : vector<8x512xf32>, vector<8x512xf32>, vector<8x512xf32>, vector<8x512xf32>, vector<8x512xf32>, vector<8x512xf32>, vector<8x512xf32>, vector<8x512xf32>, vector<8x512xf32> -> vector<72x512xf32>
    %cst_62 = arith.constant dense<0.000000e+00> : vector<8x512xf32>
    %83 = tpu.matmul %49, %82, %cst_62 {dimension_numbers = #tpu.dot_dimension_numbers<[1], [0], [0], [1], [0, 0, 1, 1], [], []>} : vector<8x72xf32>, vector<72x512xf32>, vector<8x512xf32> -> vector<8x512xf32>
    %c0_63 = arith.constant 0 : index
    %c0_64 = arith.constant 0 : index
    %84 = vector.load %arg9[%c0_63, %c0_64] : memref<8x1xf32, #tpu.memory_space<vmem>>, vector<8x1xf32>
    %85 = vector.broadcast %84 : vector<8x1xf32> to vector<8x512xf32>
    %86 = arith.mulf %83, %85 : vector<8x512xf32>
    %c0_65 = arith.constant 0 : index
    %c0_66 = arith.constant 0 : index
    %87 = vector.load %arg10[%c0_65, %c0_66] : memref<8x1xf32, #tpu.memory_space<vmem>>, vector<8x1xf32>
    %88 = vector.broadcast %87 : vector<8x1xf32> to vector<8x512xf32>
    %89 = arith.addf %86, %88 : vector<8x512xf32>
    %cst_67 = arith.constant 0.000000e+00 : f32
    %90 = vector.broadcast %cst_67 : f32 to vector<8x512xf32>
    %91 = arith.cmpf ogt, %89, %90 : vector<8x512xf32>
    %cst_68 = arith.constant 1.000000e-01 : f32
    %92 = vector.broadcast %cst_68 : f32 to vector<8x512xf32>
    %93 = arith.mulf %92, %89 : vector<8x512xf32>
    %94 = arith.select %91, %89, %93 : vector<8x512xi1>, vector<8x512xf32>
    %c0_69 = arith.constant 0 : index
    %c0_70 = arith.constant 0 : index
    %95 = vector.load %arg11[%c0_69, %c0_70] : memref<8x512xf32, #tpu.memory_space<vmem>>, vector<8x512xf32>
    tpu.vector_store %arg11[%c0_69, %c0_70], %94 {strides = array<i32>} : memref<8x512xf32, #tpu.memory_space<vmem>>, vector<8x512xf32>,
    return
  }
  func.func @transform_0(%arg0: i32) -> (i32, i32) {
    %c0_i32 = arith.constant 0 : i32
    %c0_i32_0 = arith.constant 0 : i32
    %c0_i32_1 = arith.constant 0 : i32
    return %c0_i32, %c0_i32_0 : i32, i32
  }
  func.func @transform_1(%arg0: i32) -> (i32, i32, i32) {
    %c0_i32 = arith.constant 0 : i32
    %c0_i32_0 = arith.constant 0 : i32
    %c0_i32_1 = arith.constant 0 : i32
    %c0_i32_2 = arith.constant 0 : i32
    return %c0_i32, %c0_i32_0, %c0_i32_1 : i32, i32, i32
  }
  func.func @transform_2(%arg0: i32) -> (i32, i32, i32) {
    %c0_i32 = arith.constant 0 : i32
    %c0_i32_0 = arith.constant 0 : i32
    %c0_i32_1 = arith.constant 0 : i32
    %c0_i32_2 = arith.constant 0 : i32
    return %c0_i32, %c0_i32_0, %c0_i32_1 : i32, i32, i32
  }
  func.func @transform_3(%arg0: i32) -> (i32, i32) {
    %c0_i32 = arith.constant 0 : i32
    %c0_i32_0 = arith.constant 0 : i32
    %c0_i32_1 = arith.constant 0 : i32
    return %c0_i32, %c0_i32_0 : i32, i32
  }
  func.func @transform_4(%arg0: i32) -> (i32, i32) {
    %c0_i32 = arith.constant 0 : i32
    %c0_i32_0 = arith.constant 0 : i32
    %c0_i32_1 = arith.constant 0 : i32
    return %c0_i32, %c0_i32_0 : i32, i32
  }
  func.func @transform_5(%arg0: i32) -> (i32, i32) {
    %c0_i32 = arith.constant 0 : i32
    %c0_i32_0 = arith.constant 0 : i32
    %c0_i32_1 = arith.constant 0 : i32
    return %c0_i32, %c0_i32_0 : i32, i32
  }
  func.func @transform_6(%arg0: i32) -> (i32, i32) {
    %c0_i32 = arith.constant 0 : i32
    %c0_i32_0 = arith.constant 0 : i32
    %c0_i32_1 = arith.constant 0 : i32
    return %c0_i32, %c0_i32_0 : i32, i32
  }
  func.func @transform_7(%arg0: i32) -> (i32, i32) {
    %c0_i32 = arith.constant 0 : i32
    %c0_i32_0 = arith.constant 0 : i32
    %c0_i32_1 = arith.constant 0 : i32
    return %c0_i32, %c0_i32_0 : i32, i32
  }
  func.func @transform_8(%arg0: i32) -> (i32, i32) {
    %c0_i32 = arith.constant 0 : i32
    %c0_i32_0 = arith.constant 0 : i32
    %c0_i32_1 = arith.constant 0 : i32
    return %c0_i32, %c0_i32_0 : i32, i32
  }
  func.func @transform_9(%arg0: i32) -> (i32, i32) {
    %c0_i32 = arith.constant 0 : i32
    %c0_i32_0 = arith.constant 0 : i32
    %c0_i32_1 = arith.constant 0 : i32
    return %c0_i32, %c0_i32_0 : i32, i32
  }
  func.func @transform_10(%arg0: i32) -> (i32, i32) {
    %c0_i32 = arith.constant 0 : i32
    %c0_i32_0 = arith.constant 0 : i32
    %c0_i32_1 = arith.constant 0 : i32
    return %c0_i32, %c0_i32_0 : i32, i32
  }
}

</mosaic_0001>

<llo_original>
// kernel: tpu_custom_call.1
$region0: #{tpu_custom_call.1}
  #allocation0 [shape = 'u32[]', space=smem, size = 0x4, offset = 0x4, fixed_abs, tag = 'smem constant byte address 0x4 - core index']
  #allocation1 [shape = 'u32[144,128]{1,0:T(1,128)}', space=vmem, size = 0x12000, scoped, tag = 'internal scratch']
  %s0 = inlined_call_operand.vmem [shape: f32[4,512], index: 0, kind: input, shape index: {}]
  %s1 = inlined_call_operand.hbm [shape: f32[9,4,512], index: 1, kind: input, shape index: {}]
  %s2 = inlined_call_operand.hbm [shape: f32[9,8,512], index: 2, kind: input, shape index: {}]
  %s3 = inlined_call_operand.hbm [shape: f32[8,36], index: 3, kind: input, shape index: {}]
  %s4 = inlined_call_operand.vmem [shape: f32[8,512], index: 4, kind: input, shape index: {}]
  %s5 = inlined_call_operand.vmem [shape: f32[8,1], index: 5, kind: input, shape index: {}]
  %s6 = inlined_call_operand.vmem [shape: f32[8,1], index: 6, kind: input, shape index: {}]
  %s7 = inlined_call_operand.vmem [shape: f32[8,72], index: 7, kind: input, shape index: {}]
  %s8 = inlined_call_operand.vmem [shape: f32[8,1], index: 8, kind: input, shape index: {}]
  %s9 = inlined_call_operand.vmem [shape: f32[8,1], index: 9, kind: input, shape index: {}]
  %s10 = inlined_call_operand.hbm [shape: f32[8,512], index: 10, kind: output, shape index: {}]
  %s11 = sld [smem:[#allocation0]]
  $region62: #{tpu_custom_call.1} parent=0
    _
  %s13 = ssub.s32 1, %s11
  %s14 = scalar_select 0, %s13, %s11
  $region1: #{tpu_custom_call.1} parent=0
    #allocation2 [shape = 'u8[73728]{0}', space=vmem, size = 0x12000, scoped, tag = 'input window, operand 1, single buffered']
    #allocation3 [shape = 's32[1]{0}', space=sflag, size = 0x4, scoped, tag = 'scoped memory for tpu_custom_call.1']
    #allocation4 [shape = 's32[1]{0}', space=sflag, size = 0x4, scoped, tag = 'scoped memory for tpu_custom_call.1']
    #allocation5 [shape = 'u8[147456]{0}', space=vmem, size = 0x24000, scoped, tag = 'input window, operand 2, single buffered']
    #allocation6 [shape = 's32[1]{0}', space=sflag, size = 0x4, scoped, tag = 'scoped memory for tpu_custom_call.1']
    #allocation7 [shape = 'u8[4096]{0}', space=vmem, size = 0x1000, scoped, tag = 'input window, operand 3, single buffered']
    #allocation8 [shape = 'u8[16384]{0}', space=vmem, size = 0x4000, scoped, tag = 'output window, operand 0, single buffered']
    %15 = vsyncpa [#allocation3], 0
    %16 = vsyncpa [#allocation6], 0
    %17 = vsyncpa [#allocation4], 0
    // Predicated region
    $region2: #{tpu_custom_call.1} parent=1 // pred_check
      _
    $region3: #{tpu_custom_call.1} parent=1 // pred_check_branch
      %19 = sbr.rel (0) target = $region5
    $region4: #{tpu_custom_call.1} parent=1 // pred_region
      _
    $region5: #{tpu_custom_call.1} parent=1 // pred_fallthru
      _
    // Predicated region
    $region6: #{tpu_custom_call.1} parent=1 // pred_check
      _
    $region7: #{tpu_custom_call.1} parent=1 // pred_check_branch
      %21 = sbr.rel (0) target = $region9
    $region8: #{tpu_custom_call.1} parent=1 // pred_region
      %s23 = ssub.s32 2304, 2304
      %24 = vsyncadd [#allocation3], %s23
      %s25 = sshll.u32 [#allocation2], 4
      %s26 = int_to_ptr.vmem [resolvable:$true] %s25
      %31 = dma.hbm_to_vmem [thread:$0]  %s1, 2304, %s26, [#allocation3], 256, 256, 16
    $region9: #{tpu_custom_call.1} parent=1 // pred_fallthru
      _
    // Predicated region
    $region10: #{tpu_custom_call.1} parent=1 // pred_check
      _
    $region11: #{tpu_custom_call.1} parent=1 // pred_check_branch
      %33 = sbr.rel (0) target = $region13
    $region12: #{tpu_custom_call.1} parent=1 // pred_region
      %s35 = ssub.s32 4608, 4608
      %36 = vsyncadd [#allocation6], %s35
      %s37 = sshll.u32 [#allocation5], 4
      %s38 = int_to_ptr.vmem [resolvable:$true] %s37
      %43 = dma.hbm_to_vmem [thread:$0]  %s2, 4608, %s38, [#allocation6], 512, 512, 32
    $region13: #{tpu_custom_call.1} parent=1 // pred_fallthru
      _
    // Predicated region
    $region14: #{tpu_custom_call.1} parent=1 // pred_check
      _
    $region15: #{tpu_custom_call.1} parent=1 // pred_check_branch
      %45 = sbr.rel (0) target = $region17
    $region16: #{tpu_custom_call.1} parent=1 // pred_region
      %s47 = ssub.s32 128, 128
      %48 = vsyncadd [#allocation6], %s47
      %s50 = sshll.u32 [#allocation7], 4
      %s51 = int_to_ptr.vmem [resolvable:$true] %s50
      %53 = dma.hbm_to_vmem [thread:$0]  %s3, 128, %s51, [#allocation6]
    $region17: #{tpu_custom_call.1} parent=1 // pred_fallthru
      _
    // Predicated region
    $region18: #{tpu_custom_call.1} parent=1 // pred_check
      _
    $region19: #{tpu_custom_call.1} parent=1 // pred_check_branch
      %55 = sbr.rel (0) target = $region21
    $region20: #{tpu_custom_call.1} parent=1 // pred_region
      _
    $region21: #{tpu_custom_call.1} parent=1 // pred_fallthru
      _
    // Predicated region
    $region22: #{tpu_custom_call.1} parent=1 // pred_check
      _
    $region23: #{tpu_custom_call.1} parent=1 // pred_check_branch
      %57 = sbr.rel (0) target = $region25
    $region24: #{tpu_custom_call.1} parent=1 // pred_region
      _
    $region25: #{tpu_custom_call.1} parent=1 // pred_fallthru
      _
    // Predicated region
    $region26: #{tpu_custom_call.1} parent=1 // pred_check
      _
    $region27: #{tpu_custom_call.1} parent=1 // pred_check_branch
      %59 = sbr.rel (0) target = $region29
    $region28: #{tpu_custom_call.1} parent=1 // pred_region
      _
    $region29: #{tpu_custom_call.1} parent=1 // pred_fallthru
      _
    // Predicated region
    $region30: #{tpu_custom_call.1} parent=1 // pred_check
      _
    $region31: #{tpu_custom_call.1} parent=1 // pred_check_branch
      %61 = sbr.rel (0) target = $region33
    $region32: #{tpu_custom_call.1} parent=1 // pred_region
      _
    $region33: #{tpu_custom_call.1} parent=1 // pred_fallthru
      _
    // Predicated region
    $region34: #{tpu_custom_call.1} parent=1 // pred_check
      _
    $region35: #{tpu_custom_call.1} parent=1 // pred_check_branch
      %63 = sbr.rel (0) target = $region37
    $region36: #{tpu_custom_call.1} parent=1 // pred_region
      _
    $region37: #{tpu_custom_call.1} parent=1 // pred_fallthru
      _
    // Predicated region
    $region38: #{tpu_custom_call.1} parent=1 // pred_check
      _
    $region39: #{tpu_custom_call.1} parent=1 // pred_check_branch
      %65 = sbr.rel (0) target = $region41
    $region40: #{tpu_custom_call.1} parent=1 // pred_region
      _
    $region41: #{tpu_custom_call.1} parent=1 // pred_fallthru
      _
    // Predicated region
    $region42: #{tpu_custom_call.1} parent=1 // pred_check
      _
    $region43: #{tpu_custom_call.1} parent=1 // pred_check_branch
      %67 = sbr.rel (0) target = $region45
    $region44: #{tpu_custom_call.1} parent=1 // pred_region
      %68 = dma.done [#allocation3], 2304
    $region45: #{tpu_custom_call.1} parent=1 // pred_fallthru
      _
    // Predicated region
    $region46: #{tpu_custom_call.1} parent=1 // pred_check
      _
    $region47: #{tpu_custom_call.1} parent=1 // pred_check_branch
      %70 = sbr.rel (0) target = $region49
    $region48: #{tpu_custom_call.1} parent=1 // pred_region
      %71 = dma.done [#allocation6], 4608
    $region49: #{tpu_custom_call.1} parent=1 // pred_fallthru
      _
    // Predicated region
    $region50: #{tpu_custom_call.1} parent=1 // pred_check
      _
    $region51: #{tpu_custom_call.1} parent=1 // pred_check_branch
      %73 = sbr.rel (0) target = $region53
    $region52: #{tpu_custom_call.1} parent=1 // pred_region
      %74 = dma.done [#allocation6], 128
    $region53: #{tpu_custom_call.1} parent=1 // pred_fallthru
      _
    %v75 = vld [vmem:[%s0] sm:$0xff]
    %v76 = vld [vmem:[%s0 + $0x8] sm:$0xff]
    %v77 = vld [vmem:[#allocation7] sm:$0xff]
    %v80 = vcombine.high %v75, %v75
    %v81 = vcombine.high %v76, %v76
    %84 = vrot.lane.b32.xlu0 %v75, 17
    %v85 = vpop.permute.xlu0 %84
    %86 = vrot.lane.b32.xlu0 %v80, 17
    %v87 = vpop.permute.xlu0 %86
    %88 = vrot.lane.b32.xlu0 %v76, 17
    %v89 = vpop.permute.xlu0 %88
    %90 = vrot.lane.b32.xlu0 %v81, 17
    %v91 = vpop.permute.xlu0 %90
    %v92 = vlaneseq
    %v93 = vand.u32 %v92, 127
    %vm94 = vcmp.lt.s32.totalorder %v93, 17
    %v95 = vsel %vm94, %v89, %v91
    %v96 = vsel %vm94, %v87, %v89
    %v97 = vsel %vm94, %v85, %v87
    %v98 = vsel %vm94, %v91, %v85
    %v99 = vld [vmem:[#allocation2] sm:$0xff]
    %v100 = vld [vmem:[#allocation2 + $0x8] sm:$0xff]
    %v103 = vcombine.high %v99, %v99
    %v104 = vcombine.high %v100, %v100
    %v107 = vmul.f32 %v98, %v99
    %v108 = vmul.f32 %v97, %v103
    %v109 = vmul.f32 %v96, %v100
    %v110 = vmul.f32 %v95, %v104
    %111 = vrot.lane.b32.xlu0 %v75, 16
    %v112 = vpop.permute.xlu0 %111
    %113 = vrot.lane.b32.xlu0 %v80, 16
    %v114 = vpop.permute.xlu0 %113
    %115 = vrot.lane.b32.xlu0 %v76, 16
    %v116 = vpop.permute.xlu0 %115
    %117 = vrot.lane.b32.xlu0 %v81, 16
    %v118 = vpop.permute.xlu0 %117
    %vm119 = vcmp.lt.s32.totalorder %v93, 16
    %v120 = vsel %vm119, %v116, %v118
    %v121 = vsel %vm119, %v114, %v116
    %v122 = vsel %vm119, %v112, %v114
    %v123 = vsel %vm119, %v118, %v112
    %s124 = scalar_lea.vmem [#allocation2], 16
    %v125 = vld [vmem:[%s124] sm:$0xff]
    %v126 = vld [vmem:[%s124 + $0x8] sm:$0xff]
    %v129 = vcombine.high %v125, %v125
    %v130 = vcombine.high %v126, %v126
    %v133 = vmul.f32 %v123, %v125
    %v134 = vmul.f32 %v122, %v129
    %v135 = vmul.f32 %v121, %v126
    %v136 = vmul.f32 %v120, %v130
    %137 = vrot.lane.b32.xlu0 %v75, 15
    %v138 = vpop.permute.xlu0 %137
    %139 = vrot.lane.b32.xlu0 %v80, 15
    %v140 = vpop.permute.xlu0 %139
    %141 = vrot.lane.b32.xlu0 %v76, 15
    %v142 = vpop.permute.xlu0 %141
    %143 = vrot.lane.b32.xlu0 %v81, 15
    %v144 = vpop.permute.xlu0 %143
    %vm145 = vcmp.lt.s32.totalorder %v93, 15
    %v146 = vsel %vm145, %v142, %v144
    %v147 = vsel %vm145, %v140, %v142
    %v148 = vsel %vm145, %v138, %v140
    %v149 = vsel %vm145, %v144, %v138
    %s150 = scalar_lea.vmem [#allocation2], 32
    %v151 = vld [vmem:[%s150] sm:$0xff]
    %v152 = vld [vmem:[%s150 + $0x8] sm:$0xff]
    %v155 = vcombine.high %v151, %v151
    %v156 = vcombine.high %v152, %v152
    %v159 = vmul.f32 %v149, %v151
    %v160 = vmul.f32 %v148, %v155
    %v161 = vmul.f32 %v147, %v152
    %v162 = vmul.f32 %v146, %v156
    %163 = vrot.lane.b32.xlu0 %v75, 1
    %v164 = vpop.permute.xlu0 %163
    %165 = vrot.lane.b32.xlu0 %v80, 1
    %v166 = vpop.permute.xlu0 %165
    %167 = vrot.lane.b32.xlu0 %v76, 1
    %v168 = vpop.permute.xlu0 %167
    %169 = vrot.lane.b32.xlu0 %v81, 1
    %v170 = vpop.permute.xlu0 %169
    %vm171 = vcmp.lt.s32.totalorder %v93, 1
    %v172 = vsel %vm171, %v168, %v170
    %v173 = vsel %vm171, %v166, %v168
    %v174 = vsel %vm171, %v164, %v166
    %v175 = vsel %vm171, %v170, %v164
    %s176 = scalar_lea.vmem [#allocation2], 48
    %v177 = vld [vmem:[%s176] sm:$0xff]
    %v178 = vld [vmem:[%s176 + $0x8] sm:$0xff]
    %v181 = vcombine.high %v177, %v177
    %v182 = vcombine.high %v178, %v178
    %v185 = vmul.f32 %v175, %v177
    %v186 = vmul.f32 %v174, %v181
    %v187 = vmul.f32 %v173, %v178
    %v188 = vmul.f32 %v172, %v182
    %189 = vrot.lane.b32.xlu0 %v75, 127
    %v190 = vpop.permute.xlu0 %189
    %191 = vrot.lane.b32.xlu0 %v80, 127
    %v192 = vpop.permute.xlu0 %191
    %193 = vrot.lane.b32.xlu0 %v76, 127
    %v194 = vpop.permute.xlu0 %193
    %195 = vrot.lane.b32.xlu0 %v81, 127
    %v196 = vpop.permute.xlu0 %195
    %vm197 = vcmp.lt.s32.totalorder %v93, 127
    %v198 = vsel %vm197, %v194, %v196
    %v199 = vsel %vm197, %v192, %v194
    %v200 = vsel %vm197, %v190, %v192
    %v201 = vsel %vm197, %v196, %v190
    %s202 = scalar_lea.vmem [#allocation2], 80
    %v203 = vld [vmem:[%s202] sm:$0xff]
    %v204 = vld [vmem:[%s202 + $0x8] sm:$0xff]
    %v207 = vcombine.high %v203, %v203
    %v208 = vcombine.high %v204, %v204
    %v211 = vmul.f32 %v200, %v203
    %v212 = vmul.f32 %v199, %v207
    %v213 = vmul.f32 %v198, %v204
    %v214 = vmul.f32 %v201, %v208
    %215 = vrot.lane.b32.xlu0 %v75, 113
    %v216 = vpop.permute.xlu0 %215
    %217 = vrot.lane.b32.xlu0 %v80, 113
    %v218 = vpop.permute.xlu0 %217
    %219 = vrot.lane.b32.xlu0 %v76, 113
    %v220 = vpop.permute.xlu0 %219
    %221 = vrot.lane.b32.xlu0 %v81, 113
    %v222 = vpop.permute.xlu0 %221
    %vm223 = vcmp.lt.s32.totalorder %v93, 113
    %v224 = vsel %vm223, %v220, %v222
    %v225 = vsel %vm223, %v218, %v220
    %v226 = vsel %vm223, %v216, %v218
    %v227 = vsel %vm223, %v222, %v216
    %s228 = scalar_lea.vmem [#allocation2], 96
    %v229 = vld [vmem:[%s228] sm:$0xff]
    %v230 = vld [vmem:[%s228 + $0x8] sm:$0xff]
    %v233 = vcombine.high %v229, %v229
    %v234 = vcombine.high %v230, %v230
    %v237 = vmul.f32 %v226, %v229
    %v238 = vmul.f32 %v225, %v233
    %v239 = vmul.f32 %v224, %v230
    %v240 = vmul.f32 %v227, %v234
    %241 = vrot.lane.b32.xlu0 %v75, 112
    %v242 = vpop.permute.xlu0 %241
    %243 = vrot.lane.b32.xlu0 %v80, 112
    %v244 = vpop.permute.xlu0 %243
    %245 = vrot.lane.b32.xlu0 %v76, 112
    %v246 = vpop.permute.xlu0 %245
    %247 = vrot.lane.b32.xlu0 %v81, 112
    %v248 = vpop.permute.xlu0 %247
    %vm249 = vcmp.lt.s32.totalorder %v93, 112
    %v250 = vsel %vm249, %v246, %v248
    %v251 = vsel %vm249, %v244, %v246
    %v252 = vsel %vm249, %v242, %v244
    %v253 = vsel %vm249, %v248, %v242
    %s254 = scalar_lea.vmem [#allocation2], 112
    %v255 = vld [vmem:[%s254] sm:$0xff]
    %v256 = vld [vmem:[%s254 + $0x8] sm:$0xff]
    %v259 = vcombine.high %v255, %v255
    %v260 = vcombine.high %v256, %v256
    %v263 = vmul.f32 %v252, %v255
    %v264 = vmul.f32 %v251, %v259
    %v265 = vmul.f32 %v250, %v256
    %v266 = vmul.f32 %v253, %v260
    %267 = vrot.lane.b32.xlu0 %v75, 111
    %v268 = vpop.permute.xlu0 %267
    %269 = vrot.lane.b32.xlu0 %v80, 111
    %v270 = vpop.permute.xlu0 %269
    %271 = vrot.lane.b32.xlu0 %v76, 111
    %v272 = vpop.permute.xlu0 %271
    %273 = vrot.lane.b32.xlu0 %v81, 111
    %v274 = vpop.permute.xlu0 %273
    %vm275 = vcmp.lt.s32.totalorder %v93, 111
    %v276 = vsel %vm275, %v272, %v274
    %v277 = vsel %vm275, %v270, %v272
    %v278 = vsel %vm275, %v268, %v270
    %v279 = vsel %vm275, %v274, %v268
    %s280 = scalar_lea.vmem [#allocation2], 128
    %v281 = vld [vmem:[%s280] sm:$0xff]
    %v282 = vld [vmem:[%s280 + $0x8] sm:$0xff]
    %v285 = vcombine.high %v281, %v281
    %v286 = vcombine.high %v282, %v282
    %v289 = vmul.f32 %v278, %v281
    %v290 = vmul.f32 %v277, %v285
    %v291 = vmul.f32 %v276, %v282
    %v292 = vmul.f32 %v279, %v286
    %v297 = vrot.slane %v133, 4
    %v298 = vrot.slane %v134, 4
    %v299 = vrot.slane %v135, 4
    %v300 = vrot.slane %v136, 4
    %v309 = vrot.slane %v185, 4
    %v310 = vrot.slane %v186, 4
    %v311 = vrot.slane %v187, 4
    %v312 = vrot.slane %v188, 4
    %v321 = vrot.slane %v211, 4
    %v322 = vrot.slane %v212, 4
    %v323 = vrot.slane %v213, 4
    %v324 = vrot.slane %v214, 4
    %v333 = vrot.slane %v263, 4
    %v334 = vrot.slane %v264, 4
    %v335 = vrot.slane %v265, 4
    %v336 = vrot.slane %v266, 4
    %vm341 = vcmask 1043456
    %v342 = vsel %vm341, %v107, %v297
    %v343 = vsel %vm341, %v108, %v298
    %v344 = vsel %vm341, %v109, %v299
    %v345 = vsel %vm341, %v110, %v300
    %v346 = vsel %vm341, %v159, %v309
    %v347 = vsel %vm341, %v160, %v310
    %v348 = vsel %vm341, %v161, %v311
    %v349 = vsel %vm341, %v162, %v312
    %v350 = vsel %vm341, %v75, %v321
    %v351 = vsel %vm341, %v80, %v322
    %v352 = vsel %vm341, %v76, %v323
    %v353 = vsel %vm341, %v81, %v324
    %v354 = vsel %vm341, %v237, %v333
    %v355 = vsel %vm341, %v238, %v334
    %v356 = vsel %vm341, %v239, %v335
    %v357 = vsel %vm341, %v240, %v336
    %v358 = vld [vmem:[%s4] sm:$0xff]
    %v359 = vld [vmem:[%s4 + $0x8] sm:$0xff]
    %v360 = vld [vmem:[%s4 + $0x10] sm:$0xff]
    %v361 = vld [vmem:[%s4 + $0x18] sm:$0xff]
    %vm362 = vcmask 293888
    %v364 = vsel %vm362, %v77, 0
    %v367 = vsel %vm341, %v289, 0
    %v370 = vsel %vm341, %v290, 0
    %v373 = vsel %vm341, %v291, 0
    %v376 = vsel %vm341, %v292, 0
    %378 = vmatprep.subr.mxu0 %v343
    %379 = vmatpush1.msra.mxu0 %v342
    %380 = vmatprep.subr.mxu0 %v347
    %381 = vmatpush1.msra.mxu0 %v346
    %382 = vmatprep.subr.mxu0 %v351
    %383 = vmatpush1.msra.mxu0 %v350
    %384 = vmatprep.subr.mxu0 %v355
    %385 = vmatpush1.msra.mxu0 %v354
    %386 = vmatprep.subr.mxu0 %v370
    %387 = vmatpush1.msra.mxu0 %v367
    %388 = vmatprep.subr.mxu0 0.0
    %389 = vmatpush1.msra.mxu0 0.0
    %390 = vmatprep.subr.mxu0 0.0
    %391 = vmatpush1.msra.mxu0 0.0
    %392 = vmatprep.subr.mxu0 0.0
    %393 = vmatpush1.msra.mxu0 0.0
    %394 = vmatprep.subr.mxu0 0.0
    %395 = vmatpush1.msra.mxu0 0.0
    %396 = vmatprep.subr.mxu0 0.0
    %397 = vmatpush1.msra.mxu0 0.0
    %398 = vmatprep.subr.mxu0 0.0
    %399 = vmatpush1.msra.mxu0 0.0
    %400 = vmatprep.subr.mxu0 0.0
    %401 = vmatpush1.msra.mxu0 0.0
    %402 = vmatprep.subr.mxu0 0.0
    %403 = vmatpush1.msra.mxu0 0.0
    %404 = vmatprep.subr.mxu0 0.0
    %405 = vmatpush1.msra.mxu0 0.0
    %406 = vmatprep.subr.mxu0 0.0
    %407 = vmatpush1.msra.mxu0 0.0
    %408 = vmatprep.subr.mxu0 0.0
    %409 = vmatpush1.msra.mxu0 0.0
    %410 = vmatprep.subr.mxu0 0.0
    %411 = vmatpush1.msra.mxu0 0.0
    %412 = vmatprep.subr.mxu0 0.0
    %413 = vmatpush1.msra.mxu0 0.0
    %414 = vmatprep.subr.mxu0 0.0
    %415 = vmatpush1.msra.mxu0 0.0
    %416 = vmatprep.subr.mxu0 0.0
    %417 = vmatpush1.msra.mxu0 0.0
    %418 = vmatprep.subr.mxu0 0.0
    %419 = vmatpush1.msra.mxu0 0.0
    %420 = vmatprep.subr.mxu0 0.0
    %421 = vmatpush1.msra.mxu0 0.0
    %422 = vmatprep.subr.mxu0 0.0
    %423 = vmatpush1.msra.mxu0 0.0
    %424 = vmatprep.subr.mxu0 0.0
    %425 = vmatpush1.msra.mxu0 0.0
    %426 = vmatprep.subr.mxu0 0.0
    %427 = vmatpush1.msra.mxu0 0.0
    %428 = vmatprep.subr.mxu0 0.0
    %429 = vmatpush1.msra.mxu0 0.0
    %430 = vmatprep.subr.mxu0 0.0
    %431 = vmatpush1.msra.mxu0 0.0
    %432 = vmatprep.subr.mxu0 0.0
    %433 = vmatpush1.msra.mxu0 0.0
    %434 = vmatprep.subr.mxu0 0.0
    %435 = vmatpush1.msra.mxu0 0.0
    %436 = vmatprep.subr.mxu0 0.0
    %437 = vmatpush1.msra.mxu0 0.0
    %438 = vmatprep.subr.mxu0 0.0
    %439 = vmatpush1.msra.mxu0 0.0
    %440 = vmatprep.subr.mxu0 0.0
    %441 = vmatpush1.msra.mxu0 0.0
    %442 = vmatprep.mubr.f32.mxu0 0.0
    %443 = vmatmul.mubr.f32.gmra.mrb[0].mxu0 %v364
    %v444 = vpop.f32.mrb[0].mxu0
    %v445 = vadd.f32 %v358, %v444
    %v446 = vpop.f32.mrb[0].mxu0
    %v447 = vadd.f32 %v359, %v446
    %448 = vdwg.mxu0
    %449 = vmatprep.subr.mxu0 %v345
    %450 = vmatpush1.msra.mxu0 %v344
    %451 = vmatprep.subr.mxu0 %v349
    %452 = vmatpush1.msra.mxu0 %v348
    %453 = vmatprep.subr.mxu0 %v353
    %454 = vmatpush1.msra.mxu0 %v352
    %455 = vmatprep.subr.mxu0 %v357
    %456 = vmatpush1.msra.mxu0 %v356
    %457 = vmatprep.subr.mxu0 %v376
    %458 = vmatpush1.msra.mxu0 %v373
    %459 = vmatprep.subr.mxu0 0.0
    %460 = vmatpush1.msra.mxu0 0.0
    %461 = vmatprep.subr.mxu0 0.0
    %462 = vmatpush1.msra.mxu0 0.0
    %463 = vmatprep.subr.mxu0 0.0
    %464 = vmatpush1.msra.mxu0 0.0
    %465 = vmatprep.subr.mxu0 0.0
    %466 = vmatpush1.msra.mxu0 0.0
    %467 = vmatprep.subr.mxu0 0.0
    %468 = vmatpush1.msra.mxu0 0.0
    %469 = vmatprep.subr.mxu0 0.0
    %470 = vmatpush1.msra.mxu0 0.0
    %471 = vmatprep.subr.mxu0 0.0
    %472 = vmatpush1.msra.mxu0 0.0
    %473 = vmatprep.subr.mxu0 0.0
    %474 = vmatpush1.msra.mxu0 0.0
    %475 = vmatprep.subr.mxu0 0.0
    %476 = vmatpush1.msra.mxu0 0.0
    %477 = vmatprep.subr.mxu0 0.0
    %478 = vmatpush1.msra.mxu0 0.0
    %479 = vmatprep.subr.mxu0 0.0
    %480 = vmatpush1.msra.mxu0 0.0
    %481 = vmatprep.subr.mxu0 0.0
    %482 = vmatpush1.msra.mxu0 0.0
    %483 = vmatprep.subr.mxu0 0.0
    %484 = vmatpush1.msra.mxu0 0.0
    %485 = vmatprep.subr.mxu0 0.0
    %486 = vmatpush1.msra.mxu0 0.0
    %487 = vmatprep.subr.mxu0 0.0
    %488 = vmatpush1.msra.mxu0 0.0
    %489 = vmatprep.subr.mxu0 0.0
    %490 = vmatpush1.msra.mxu0 0.0
    %491 = vmatprep.subr.mxu0 0.0
    %492 = vmatpush1.msra.mxu0 0.0
    %493 = vmatprep.subr.mxu0 0.0
    %494 = vmatpush1.msra.mxu0 0.0
    %495 = vmatprep.subr.mxu0 0.0
    %496 = vmatpush1.msra.mxu0 0.0
    %497 = vmatprep.subr.mxu0 0.0
    %498 = vmatpush1.msra.mxu0 0.0
    %499 = vmatprep.subr.mxu0 0.0
    %500 = vmatpush1.msra.mxu0 0.0
    %501 = vmatprep.subr.mxu0 0.0
    %502 = vmatpush1.msra.mxu0 0.0
    %503 = vmatprep.subr.mxu0 0.0
    %504 = vmatpush1.msra.mxu0 0.0
    %505 = vmatprep.subr.mxu0 0.0
    %506 = vmatpush1.msra.mxu0 0.0
    %507 = vmatprep.subr.mxu0 0.0
    %508 = vmatpush1.msra.mxu0 0.0
    %509 = vmatprep.subr.mxu0 0.0
    %510 = vmatpush1.msra.mxu0 0.0
    %511 = vmatprep.subr.mxu0 0.0
    %512 = vmatpush1.msra.mxu0 0.0
    %513 = vmatprep.mubr.f32.mxu0 0.0
    %514 = vmatmul.mubr.f32.gmra.mrb[0].mxu0 %v364
    %v515 = vpop.f32.mrb[0].mxu0
    %v516 = vadd.f32 %v360, %v515
    %v517 = vpop.f32.mrb[0].mxu0
    %v518 = vadd.f32 %v361, %v517
    %519 = vdwg.mxu0
    %v520 = vld [vmem:[%s5] sm:$0xff]
    %522 = vset.pattern.permute.xlu0 0
    %523 = vperm.xlu0 %522, %v520
    %v524 = vpop.permute.xlu0 %523
    %v526 = vmul.f32 %v445, %v524
    %v527 = vmul.f32 %v447, %v524
    %v528 = vmul.f32 %v516, %v524
    %v529 = vmul.f32 %v518, %v524
    %v530 = vld [vmem:[%s6] sm:$0xff]
    %532 = vset.pattern.permute.xlu0 0
    %533 = vperm.xlu0 %532, %v530
    %v534 = vpop.permute.xlu0 %533
    %v536 = vadd.f32 %v526, %v534
    %v537 = vadd.f32 %v527, %v534
    %v538 = vadd.f32 %v528, %v534
    %v539 = vadd.f32 %v529, %v534
    %vm540 = vcmp.gt.f32.partialorder %v536, 0.0
    %vm541 = vcmp.gt.f32.partialorder %v537, 0.0
    %vm542 = vcmp.gt.f32.partialorder %v538, 0.0
    %vm543 = vcmp.gt.f32.partialorder %v539, 0.0
    %v544 = vmul.f32 %v536, 0.1
    %v545 = vmul.f32 %v537, 0.1
    %v546 = vmul.f32 %v538, 0.1
    %v547 = vmul.f32 %v539, 0.1
    %v548 = vsel %vm540, %v536, %v544
    %v549 = vsel %vm541, %v537, %v545
    %v550 = vsel %vm542, %v538, %v546
    %v551 = vsel %vm543, %v539, %v547
    %v552 = vld [vmem:[%s7] sm:$0xff]
    %553 = vrot.lane.b32.xlu0 %v548, 17
    %v554 = vpop.permute.xlu0 %553
    %555 = vrot.lane.b32.xlu0 %v549, 17
    %v556 = vpop.permute.xlu0 %555
    %557 = vrot.lane.b32.xlu0 %v550, 17
    %v558 = vpop.permute.xlu0 %557
    %559 = vrot.lane.b32.xlu0 %v551, 17
    %v560 = vpop.permute.xlu0 %559
    %v561 = vsel %vm94, %v558, %v560
    %v562 = vsel %vm94, %v556, %v558
    %v563 = vsel %vm94, %v554, %v556
    %v564 = vsel %vm94, %v560, %v554
    %v565 = vld [vmem:[#allocation5] sm:$0xff]
    %v566 = vld [vmem:[#allocation5 + $0x8] sm:$0xff]
    %v567 = vld [vmem:[#allocation5 + $0x10] sm:$0xff]
    %v568 = vld [vmem:[#allocation5 + $0x18] sm:$0xff]
    %v569 = vmul.f32 %v564, %v565
    %v570 = vmul.f32 %v563, %v566
    %v571 = vmul.f32 %v562, %v567
    %v572 = vmul.f32 %v561, %v568
    %573 = vrot.lane.b32.xlu0 %v548, 16
    %v574 = vpop.permute.xlu0 %573
    %575 = vrot.lane.b32.xlu0 %v549, 16
    %v576 = vpop.permute.xlu0 %575
    %577 = vrot.lane.b32.xlu0 %v550, 16
    %v578 = vpop.permute.xlu0 %577
    %579 = vrot.lane.b32.xlu0 %v551, 16
    %v580 = vpop.permute.xlu0 %579
    %v581 = vsel %vm119, %v578, %v580
    %v582 = vsel %vm119, %v576, %v578
    %v583 = vsel %vm119, %v574, %v576
    %v584 = vsel %vm119, %v580, %v574
    %s585 = scalar_lea.vmem [#allocation5], 32
    %v586 = vld [vmem:[%s585] sm:$0xff]
    %v587 = vld [vmem:[%s585 + $0x8] sm:$0xff]
    %v588 = vld [vmem:[%s585 + $0x10] sm:$0xff]
    %v589 = vld [vmem:[%s585 + $0x18] sm:$0xff]
    %v590 = vmul.f32 %v584, %v586
    %v591 = vmul.f32 %v583, %v587
    %v592 = vmul.f32 %v582, %v588
    %v593 = vmul.f32 %v581, %v589
    %594 = vrot.lane.b32.xlu0 %v548, 15
    %v595 = vpop.permute.xlu0 %594
    %596 = vrot.lane.b32.xlu0 %v549, 15
    %v597 = vpop.permute.xlu0 %596
    %598 = vrot.lane.b32.xlu0 %v550, 15
    %v599 = vpop.permute.xlu0 %598
    %600 = vrot.lane.b32.xlu0 %v551, 15
    %v601 = vpop.permute.xlu0 %600
    %v602 = vsel %vm145, %v599, %v601
    %v603 = vsel %vm145, %v597, %v599
    %v604 = vsel %vm145, %v595, %v597
    %v605 = vsel %vm145, %v601, %v595
    %s606 = scalar_lea.vmem [#allocation5], 64
    %v607 = vld [vmem:[%s606] sm:$0xff]
    %v608 = vld [vmem:[%s606 + $0x8] sm:$0xff]
    %v609 = vld [vmem:[%s606 + $0x10] sm:$0xff]
    %v610 = vld [vmem:[%s606 + $0x18] sm:$0xff]
    %v611 = vmul.f32 %v605, %v607
    %v612 = vmul.f32 %v604, %v608
    %v613 = vmul.f32 %v603, %v609
    %v614 = vmul.f32 %v602, %v610
    %615 = vrot.lane.b32.xlu0 %v548, 1
    %v616 = vpop.permute.xlu0 %615
    %617 = vrot.lane.b32.xlu0 %v549, 1
    %v618 = vpop.permute.xlu0 %617
    %619 = vrot.lane.b32.xlu0 %v550, 1
    %v620 = vpop.permute.xlu0 %619
    %621 = vrot.lane.b32.xlu0 %v551, 1
    %v622 = vpop.permute.xlu0 %621
    %v623 = vsel %vm171, %v620, %v622
    %v624 = vsel %vm171, %v618, %v620
    %v625 = vsel %vm171, %v616, %v618
    %v626 = vsel %vm171, %v622, %v616
    %s627 = scalar_lea.vmem [#allocation5], 96
    %v628 = vld [vmem:[%s627] sm:$0xff]
    %v629 = vld [vmem:[%s627 + $0x8] sm:$0xff]
    %v630 = vld [vmem:[%s627 + $0x10] sm:$0xff]
    %v631 = vld [vmem:[%s627 + $0x18] sm:$0xff]
    %v632 = vmul.f32 %v626, %v628
    %v633 = vmul.f32 %v625, %v629
    %v634 = vmul.f32 %v624, %v630
    %v635 = vmul.f32 %v623, %v631
    %636 = vrot.lane.b32.xlu0 %v548, 127
    %v637 = vpop.permute.xlu0 %636
    %638 = vrot.lane.b32.xlu0 %v549, 127
    %v639 = vpop.permute.xlu0 %638
    %640 = vrot.lane.b32.xlu0 %v550, 127
    %v641 = vpop.permute.xlu0 %640
    %642 = vrot.lane.b32.xlu0 %v551, 127
    %v643 = vpop.permute.xlu0 %642
    %v644 = vsel %vm197, %v641, %v643
    %v645 = vsel %vm197, %v639, %v641
    %v646 = vsel %vm197, %v637, %v639
    %v647 = vsel %vm197, %v643, %v637
    %s648 = scalar_lea.vmem [#allocation5], 160
    %v649 = vld [vmem:[%s648] sm:$0xff]
    %v650 = vld [vmem:[%s648 + $0x8] sm:$0xff]
    %v651 = vld [vmem:[%s648 + $0x10] sm:$0xff]
    %v652 = vld [vmem:[%s648 + $0x18] sm:$0xff]
    %v653 = vmul.f32 %v646, %v649
    %v654 = vmul.f32 %v645, %v650
    %v655 = vmul.f32 %v644, %v651
    %v656 = vmul.f32 %v647, %v652
    %657 = vrot.lane.b32.xlu0 %v548, 113
    %v658 = vpop.permute.xlu0 %657
    %659 = vrot.lane.b32.xlu0 %v549, 113
    %v660 = vpop.permute.xlu0 %659
    %661 = vrot.lane.b32.xlu0 %v550, 113
    %v662 = vpop.permute.xlu0 %661
    %663 = vrot.lane.b32.xlu0 %v551, 113
    %v664 = vpop.permute.xlu0 %663
    %v665 = vsel %vm223, %v662, %v664
    %v666 = vsel %vm223, %v660, %v662
    %v667 = vsel %vm223, %v658, %v660
    %v668 = vsel %vm223, %v664, %v658
    %s669 = scalar_lea.vmem [#allocation5], 192
    %v670 = vld [vmem:[%s669] sm:$0xff]
    %v671 = vld [vmem:[%s669 + $0x8] sm:$0xff]
    %v672 = vld [vmem:[%s669 + $0x10] sm:$0xff]
    %v673 = vld [vmem:[%s669 + $0x18] sm:$0xff]
    %v674 = vmul.f32 %v667, %v670
    %v675 = vmul.f32 %v666, %v671
    %v676 = vmul.f32 %v665, %v672
    %v677 = vmul.f32 %v668, %v673
    %678 = vrot.lane.b32.xlu0 %v548, 112
    %v679 = vpop.permute.xlu0 %678
    %680 = vrot.lane.b32.xlu0 %v549, 112
    %v681 = vpop.permute.xlu0 %680
    %682 = vrot.lane.b32.xlu0 %v550, 112
    %v683 = vpop.permute.xlu0 %682
    %684 = vrot.lane.b32.xlu0 %v551, 112
    %v685 = vpop.permute.xlu0 %684
    %v686 = vsel %vm249, %v683, %v685
    %v687 = vsel %vm249, %v681, %v683
    %v688 = vsel %vm249, %v679, %v681
    %v689 = vsel %vm249, %v685, %v679
    %s690 = scalar_lea.vmem [#allocation5], 224
    %v691 = vld [vmem:[%s690] sm:$0xff]
    %v692 = vld [vmem:[%s690 + $0x8] sm:$0xff]
    %v693 = vld [vmem:[%s690 + $0x10] sm:$0xff]
    %v694 = vld [vmem:[%s690 + $0x18] sm:$0xff]
    %v695 = vmul.f32 %v688, %v691
    %v696 = vmul.f32 %v687, %v692
    %v697 = vmul.f32 %v686, %v693
    %v698 = vmul.f32 %v689, %v694
    %699 = vrot.lane.b32.xlu0 %v548, 111
    %v700 = vpop.permute.xlu0 %699
    %701 = vrot.lane.b32.xlu0 %v549, 111
    %v702 = vpop.permute.xlu0 %701
    %703 = vrot.lane.b32.xlu0 %v550, 111
    %v704 = vpop.permute.xlu0 %703
    %705 = vrot.lane.b32.xlu0 %v551, 111
    %v706 = vpop.permute.xlu0 %705
    %v707 = vsel %vm275, %v704, %v706
    %v708 = vsel %vm275, %v702, %v704
    %v709 = vsel %vm275, %v700, %v702
    %v710 = vsel %vm275, %v706, %v700
    %s711 = scalar_lea.vmem [#allocation5], 256
    %v712 = vld [vmem:[%s711] sm:$0xff]
    %v713 = vld [vmem:[%s711 + $0x8] sm:$0xff]
    %v714 = vld [vmem:[%s711 + $0x10] sm:$0xff]
    %v715 = vld [vmem:[%s711 + $0x18] sm:$0xff]
    %v716 = vmul.f32 %v709, %v712
    %v717 = vmul.f32 %v708, %v713
    %v718 = vmul.f32 %v707, %v714
    %v719 = vmul.f32 %v710, %v715
    %vm720 = vcmask 588800
    %v722 = vsel %vm720, %v552, 0
    %724 = vmatprep.subr.mxu0 %v570
    %725 = vmatpush1.msra.mxu0 %v569
    %726 = vmatprep.subr.mxu0 %v591
    %727 = vmatpush1.msra.mxu0 %v590
    %728 = vmatprep.subr.mxu0 %v612
    %729 = vmatpush1.msra.mxu0 %v611
    %730 = vmatprep.subr.mxu0 %v633
    %731 = vmatpush1.msra.mxu0 %v632
    %732 = vmatprep.subr.mxu0 %v549
    %733 = vmatpush1.msra.mxu0 %v548
    %734 = vmatprep.subr.mxu0 %v654
    %735 = vmatpush1.msra.mxu0 %v653
    %736 = vmatprep.subr.mxu0 %v675
    %737 = vmatpush1.msra.mxu0 %v674
    %738 = vmatprep.subr.mxu0 %v696
    %739 = vmatpush1.msra.mxu0 %v695
    %740 = vmatprep.subr.mxu0 %v717
    %741 = vmatpush1.msra.mxu0 %v716
    %742 = vmatprep.subr.mxu0 0.0
    %743 = vmatpush1.msra.mxu0 0.0
    %744 = vmatprep.subr.mxu0 0.0
    %745 = vmatpush1.msra.mxu0 0.0
    %746 = vmatprep.subr.mxu0 0.0
    %747 = vmatpush1.msra.mxu0 0.0
    %748 = vmatprep.subr.mxu0 0.0
    %749 = vmatpush1.msra.mxu0 0.0
    %750 = vmatprep.subr.mxu0 0.0
    %751 = vmatpush1.msra.mxu0 0.0
    %752 = vmatprep.subr.mxu0 0.0
    %753 = vmatpush1.msra.mxu0 0.0
    %754 = vmatprep.subr.mxu0 0.0
    %755 = vmatpush1.msra.mxu0 0.0
    %756 = vmatprep.subr.mxu0 0.0
    %757 = vmatpush1.msra.mxu0 0.0
    %758 = vmatprep.subr.mxu0 0.0
    %759 = vmatpush1.msra.mxu0 0.0
    %760 = vmatprep.subr.mxu0 0.0
    %761 = vmatpush1.msra.mxu0 0.0
    %762 = vmatprep.subr.mxu0 0.0
    %763 = vmatpush1.msra.mxu0 0.0
    %764 = vmatprep.subr.mxu0 0.0
    %765 = vmatpush1.msra.mxu0 0.0
    %766 = vmatprep.subr.mxu0 0.0
    %767 = vmatpush1.msra.mxu0 0.0
    %768 = vmatprep.subr.mxu0 0.0
    %769 = vmatpush1.msra.mxu0 0.0
    %770 = vmatprep.subr.mxu0 0.0
    %771 = vmatpush1.msra.mxu0 0.0
    %772 = vmatprep.subr.mxu0 0.0
    %773 = vmatpush1.msra.mxu0 0.0
    %774 = vmatprep.subr.mxu0 0.0
    %775 = vmatpush1.msra.mxu0 0.0
    %776 = vmatprep.subr.mxu0 0.0
    %777 = vmatpush1.msra.mxu0 0.0
    %778 = vmatprep.subr.mxu0 0.0
    %779 = vmatpush1.msra.mxu0 0.0
    %780 = vmatprep.subr.mxu0 0.0
    %781 = vmatpush1.msra.mxu0 0.0
    %782 = vmatprep.subr.mxu0 0.0
    %783 = vmatpush1.msra.mxu0 0.0
    %784 = vmatprep.subr.mxu0 0.0
    %785 = vmatpush1.msra.mxu0 0.0
    %786 = vmatprep.subr.mxu0 0.0
    %787 = vmatpush1.msra.mxu0 0.0
    %788 = vmatprep.mubr.f32.mxu0 0.0
    %789 = vmatmul.mubr.f32.gmra.mrb[0].mxu0 %v722
    %v790 = vpop.f32.mrb[0].mxu0
    %v791 = vadd.f32 0.0, %v790
    %v792 = vpop.f32.mrb[0].mxu0
    %v793 = vadd.f32 0.0, %v792
    %794 = vdwg.mxu0
    %795 = vmatprep.subr.mxu0 %v572
    %796 = vmatpush1.msra.mxu0 %v571
    %797 = vmatprep.subr.mxu0 %v593
    %798 = vmatpush1.msra.mxu0 %v592
    %799 = vmatprep.subr.mxu0 %v614
    %800 = vmatpush1.msra.mxu0 %v613
    %801 = vmatprep.subr.mxu0 %v635
    %802 = vmatpush1.msra.mxu0 %v634
    %803 = vmatprep.subr.mxu0 %v551
    %804 = vmatpush1.msra.mxu0 %v550
    %805 = vmatprep.subr.mxu0 %v656
    %806 = vmatpush1.msra.mxu0 %v655
    %807 = vmatprep.subr.mxu0 %v677
    %808 = vmatpush1.msra.mxu0 %v676
    %809 = vmatprep.subr.mxu0 %v698
    %810 = vmatpush1.msra.mxu0 %v697
    %811 = vmatprep.subr.mxu0 %v719
    %812 = vmatpush1.msra.mxu0 %v718
    %813 = vmatprep.subr.mxu0 0.0
    %814 = vmatpush1.msra.mxu0 0.0
    %815 = vmatprep.subr.mxu0 0.0
    %816 = vmatpush1.msra.mxu0 0.0
    %817 = vmatprep.subr.mxu0 0.0
    %818 = vmatpush1.msra.mxu0 0.0
    %819 = vmatprep.subr.mxu0 0.0
    %820 = vmatpush1.msra.mxu0 0.0
    %821 = vmatprep.subr.mxu0 0.0
    %822 = vmatpush1.msra.mxu0 0.0
    %823 = vmatprep.subr.mxu0 0.0
    %824 = vmatpush1.msra.mxu0 0.0
    %825 = vmatprep.subr.mxu0 0.0
    %826 = vmatpush1.msra.mxu0 0.0
    %827 = vmatprep.subr.mxu0 0.0
    %828 = vmatpush1.msra.mxu0 0.0
    %829 = vmatprep.subr.mxu0 0.0
    %830 = vmatpush1.msra.mxu0 0.0
    %831 = vmatprep.subr.mxu0 0.0
    %832 = vmatpush1.msra.mxu0 0.0
    %833 = vmatprep.subr.mxu0 0.0
    %834 = vmatpush1.msra.mxu0 0.0
    %835 = vmatprep.subr.mxu0 0.0
    %836 = vmatpush1.msra.mxu0 0.0
    %837 = vmatprep.subr.mxu0 0.0
    %838 = vmatpush1.msra.mxu0 0.0
    %839 = vmatprep.subr.mxu0 0.0
    %840 = vmatpush1.msra.mxu0 0.0
    %841 = vmatprep.subr.mxu0 0.0
    %842 = vmatpush1.msra.mxu0 0.0
    %843 = vmatprep.subr.mxu0 0.0
    %844 = vmatpush1.msra.mxu0 0.0
    %845 = vmatprep.subr.mxu0 0.0
    %846 = vmatpush1.msra.mxu0 0.0
    %847 = vmatprep.subr.mxu0 0.0
    %848 = vmatpush1.msra.mxu0 0.0
    %849 = vmatprep.subr.mxu0 0.0
    %850 = vmatpush1.msra.mxu0 0.0
    %851 = vmatprep.subr.mxu0 0.0
    %852 = vmatpush1.msra.mxu0 0.0
    %853 = vmatprep.subr.mxu0 0.0
    %854 = vmatpush1.msra.mxu0 0.0
    %855 = vmatprep.subr.mxu0 0.0
    %856 = vmatpush1.msra.mxu0 0.0
    %857 = vmatprep.subr.mxu0 0.0
    %858 = vmatpush1.msra.mxu0 0.0
    %859 = vmatprep.mubr.f32.mxu0 0.0
    %860 = vmatmul.mubr.f32.gmra.mrb[0].mxu0 %v722
    %v861 = vpop.f32.mrb[0].mxu0
    %v862 = vadd.f32 0.0, %v861
    %v863 = vpop.f32.mrb[0].mxu0
    %v864 = vadd.f32 0.0, %v863
    %865 = vdwg.mxu0
    %v866 = vld [vmem:[%s8] sm:$0xff]
    %868 = vset.pattern.permute.xlu0 0
    %869 = vperm.xlu0 %868, %v866
    %v870 = vpop.permute.xlu0 %869
    %v872 = vmul.f32 %v791, %v870
    %v873 = vmul.f32 %v793, %v870
    %v874 = vmul.f32 %v862, %v870
    %v875 = vmul.f32 %v864, %v870
    %v876 = vld [vmem:[%s9] sm:$0xff]
    %878 = vset.pattern.permute.xlu0 0
    %879 = vperm.xlu0 %878, %v876
    %v880 = vpop.permute.xlu0 %879
    %v882 = vadd.f32 %v872, %v880
    %v883 = vadd.f32 %v873, %v880
    %v884 = vadd.f32 %v874, %v880
    %v885 = vadd.f32 %v875, %v880
    %vm886 = vcmp.gt.f32.partialorder %v882, 0.0
    %vm887 = vcmp.gt.f32.partialorder %v883, 0.0
    %vm888 = vcmp.gt.f32.partialorder %v884, 0.0
    %vm889 = vcmp.gt.f32.partialorder %v885, 0.0
    %v890 = vmul.f32 %v882, 0.1
    %v891 = vmul.f32 %v883, 0.1
    %v892 = vmul.f32 %v884, 0.1
    %v893 = vmul.f32 %v885, 0.1
    %v894 = vsel %vm886, %v882, %v890
    %v895 = vsel %vm887, %v883, %v891
    %v896 = vsel %vm888, %v884, %v892
    %v897 = vsel %vm889, %v885, %v893
    %898 = vst [vmem:[#allocation8] sm:$0xff] %v894
    %899 = vst [vmem:[#allocation8 + $0x8] sm:$0xff] %v895
    %900 = vst [vmem:[#allocation8 + $0x10] sm:$0xff] %v896
    %901 = vst [vmem:[#allocation8 + $0x18] sm:$0xff] %v897
    // Predicated region
    $region54: #{tpu_custom_call.1} parent=1 // pred_check
      _
    $region55: #{tpu_custom_call.1} parent=1 // pred_check_branch
      %903 = sbr.rel (0) target = $region57
    $region56: #{tpu_custom_call.1} parent=1 // pred_region
      %s905 = ssub.s32 512, 512
      %906 = vsyncadd [#allocation4], %s905
      %s908 = sshll.u32 [#allocation8], 4
      %s909 = int_to_ptr.vmem [resolvable:$true] %s908
      %911 = dma.vmem_to_hbm [thread:$0]  %s909, 512, %s10, [#allocation4]
    $region57: #{tpu_custom_call.1} parent=1 // pred_fallthru
      _
    // Predicated region
    $region58: #{tpu_custom_call.1} parent=1 // pred_check
      _
    $region59: #{tpu_custom_call.1} parent=1 // pred_check_branch
      %913 = sbr.rel (0) target = $region61
    $region60: #{tpu_custom_call.1} parent=1 // pred_region
      %914 = dma.done [#allocation4], 512
    $region61: #{tpu_custom_call.1} parent=1 // pred_fallthru
      _
    %915 = vsyncpa [#allocation3], 1
    %916 = vsyncpa [#allocation6], 1
    %917 = vsyncpa [#allocation4], 1

</llo_original>
